<compile_context>
chip_gen: v5e
topology: v5e:2x2
jax: 0.10.0
libtpu: 0.0.40
codegen_flags: <defaults>
</compile_context>

<pallas_src>
import functools
from typing import NamedTuple, Optional

import jax
import jax.numpy as jnp
from jax.experimental import pallas as pl
from jax.experimental.pallas import tpu as pltpu


def _round_up(a: int, b: int) -> int:
    return (a + b - 1) // b * b


def _cdiv(a: int, b: int) -> int:
    return (a + b - 1) // b


def _pick_tile(dim_pad: int, cap: int) -> int:
    """Largest 128-multiple divisor of dim_pad that is <= cap (and >= 128)."""
    cap = max(128, min(cap, dim_pad))
    best, d = 128, 128
    while d <= cap:
        if dim_pad % d == 0:
            best = d
        d += 128
    return best


# ----------------------------- kernels -------------------------------------


def _linear_kernel_single_k(x_ref, w_ref, b_ref, o_ref):
    """Whole K in one tile: no scratch, no accumulator RMW. Operands are
    already in the compute dtype (bf16); accumulate in f32 on the MXU."""
    acc = jnp.dot(x_ref[...], w_ref[...], preferred_element_type=jnp.float32)
    o_ref[...] = (acc + b_ref[...]).astype(o_ref.dtype)


def _linear_kernel_acc_inplace(x_ref, w_ref, b_ref, o_ref):
    """Multi-step K reduction with f32 output: accumulate directly into the
    resident output block (no VMEM scratch; bias folded into the init)."""

    @pl.when(pl.program_id(2) == 0)
    def _():
        o_ref[...] = jnp.broadcast_to(b_ref[...], o_ref.shape)

    o_ref[...] += jnp.dot(x_ref[...], w_ref[...], preferred_element_type=jnp.float32)


def _linear_kernel_acc_scratch(x_ref, w_ref, b_ref, o_ref, acc_ref):
    """Multi-step K reduction with non-f32 output: f32 scratch accumulator,
    bias add + downcast in the finalize step."""

    @pl.when(pl.program_id(2) == 0)
    def _():
        acc_ref[...] = jnp.zeros_like(acc_ref)

    acc_ref[...] += jnp.dot(x_ref[...], w_ref[...], preferred_element_type=jnp.float32)

    @pl.when(pl.program_id(2) == pl.num_programs(2) - 1)
    def _():
        o_ref[...] = (acc_ref[...] + b_ref[...]).astype(o_ref.dtype)


# -------------------------- parameter prep ----------------------------------


class IntLinearParams(NamedTuple):
    w_t: jax.Array        # (K_pad, N_pad), compute dtype (bf16), zero-padded
    bias: jax.Array       # (1, N_pad), float32, zero-padded
    in_features: int      # K (unpadded)
    out_features: int     # N (unpadded)


def prepare_int_linear_params(
    weight: jax.Array,
    bias: Optional[jax.Array] = None,
    *,
    compute_dtype=jnp.bfloat16,
) -> IntLinearParams:
    """One-time prep: transpose to (K, N), cast to the MXU dtype, zero-pad to
    128 multiples (tile sizes are chosen per-call as divisors of the padded
    dims, so no additional padding is ever needed)."""
    N, K = weight.shape  # PyTorch layout: (out_features, in_features)
    K_pad, N_pad = _round_up(K, 128), _round_up(N, 128)

    w_t = weight.T.astype(compute_dtype)  # (K, N): out_features lane-dense
    if (K_pad, N_pad) != (K, N):
        # Zero padding along K keeps the reduction exact.
        w_t = jnp.pad(w_t, ((0, K_pad - K), (0, N_pad - N)))

    b = jnp.zeros((N,), jnp.float32) if bias is None else bias.astype(jnp.float32)
    if N_pad != N:
        b = jnp.pad(b, (0, N_pad - N))

    return IntLinearParams(w_t, b.reshape(1, N_pad), K, N)


# ------------------------------ forward -------------------------------------


def int_linear_forward(
    x: jax.Array,
    params: IntLinearParams,
    *,
    out_dtype=None,
    tm_cap: int = 512,
    tn_cap: int = 1024,
    tk_cap: int = 2048,
):
    """x: (..., in_features) -> (..., out_features). Eval-path F.linear."""
    K, N = params.in_features, params.out_features
    assert x.shape[-1] == K, (x.shape, K)
    out_dtype = jnp.dtype(out_dtype if out_dtype is not None else x.dtype)
    compute_dtype = params.w_t.dtype
    K_pad, N_pad = params.w_t.shape

    x2d = x.reshape(-1, K)
    M = x2d.shape[0]

    # ---- tile selection ----
    tk = _pick_tile(K_pad, tk_cap)
    tn = _pick_tile(N_pad, tn_cap)

    # Balance M across tiles; 16-multiple for bf16 sublane packing.
    mt = max(1, _cdiv(M, tm_cap))
    tm = _round_up(_cdiv(M, mt), 16)
    M_pad = _round_up(M, tm)
    mt = M_pad // tm

    # Decode regime: keep >=2 N tiles so both v7x TensorCores get work.
    if mt == 1 and N_pad // tn < 2 and N_pad >= 256:
        tn = _pick_tile(N_pad, N_pad // 2)

    nt, kt = N_pad // tn, K_pad // tk

    # ---- activation prep: one cast-to-bf16 pass (+ pad only if needed) ----
    if x2d.dtype != compute_dtype:
        x2d = x2d.astype(compute_dtype)
    if (M_pad, K_pad) != (M, K):
        x2d = jnp.pad(x2d, ((0, M_pad - M), (0, K_pad - K)))

    x_bytes = jnp.dtype(compute_dtype).itemsize
    w_bytes = jnp.dtype(compute_dtype).itemsize
    o_bytes = out_dtype.itemsize

    use_scratch = (kt > 1) and (out_dtype != jnp.dtype(jnp.float32))
    weight_multibuf = (mt == 1 and kt > 1)      # weight-streaming decode case
    w_bufs = 3 if weight_multibuf else 2

    # Double-buffered VMEM footprint; 48 MiB cap keeps headroom on v7x.
    vmem_bytes = (
        2 * tm * tk * x_bytes
        + w_bufs * tk * tn * w_bytes
        + 2 * 8 * tn * 4
        + 2 * tm * tn * o_bytes
        + (tm * tn * 4 if use_scratch else 0)
    )
    vmem_limit = int(min(max(int(vmem_bytes * 1.5), 32 * 1024 * 1024),
                         48 * 1024 * 1024))

    cost = pl.CostEstimate(
        flops=2 * M_pad * N_pad * K_pad,
        transcendentals=0,
        bytes_accessed=(
            # x is resident across N tiles when kt == 1 (index (i, 0)).
            (nt if kt > 1 else 1) * M_pad * K_pad * x_bytes
            + mt * K_pad * N_pad * w_bytes
            + M_pad * N_pad * o_bytes
        ),
    )

    def _weight_spec(index_map):
        if weight_multibuf and hasattr(pl, "Buffered"):
            try:
                return pl.BlockSpec((tk, tn), index_map,
                                    pipeline_mode=pl.Buffered(3))
            except TypeError:
                pass  # fall back to default double-buffering
        return pl.BlockSpec((tk, tn), index_map)

    if kt == 1:
        kernel = _linear_kernel_single_k
        grid = (mt, nt)
        in_specs = [
            pl.BlockSpec((tm, tk), lambda i, j: (i, 0)),
            pl.BlockSpec((tk, tn), lambda i, j: (0, j)),
            pl.BlockSpec((1, tn), lambda i, j: (0, j)),
        ]
        out_specs = pl.BlockSpec((tm, tn), lambda i, j: (i, j))
        scratch = []
        dims = ("parallel", "parallel")
    else:
        kernel = _linear_kernel_acc_scratch if use_scratch else _linear_kernel_acc_inplace
        grid = (mt, nt, kt)
        in_specs = [
            pl.BlockSpec((tm, tk), lambda i, j, k: (i, k)),
            _weight_spec(lambda i, j, k: (k, j)),
            pl.BlockSpec((1, tn), lambda i, j, k: (0, j)),
        ]
        out_specs = pl.BlockSpec((tm, tn), lambda i, j, k: (i, j))
        scratch = [pltpu.VMEM((tm, tn), jnp.float32)] if use_scratch else []
        dims = ("parallel", "parallel", "arbitrary")

    out = pl.pallas_call(
        kernel,
        out_shape=jax.ShapeDtypeStruct((M_pad, N_pad), out_dtype),
        grid_spec=pltpu.PrefetchScalarGridSpec(
            num_scalar_prefetch=0,
            grid=grid,
            in_specs=in_specs,
            out_specs=out_specs,
            scratch_shapes=scratch,
        ),
        compiler_params=pltpu.CompilerParams(
            dimension_semantics=dims,
            vmem_limit_bytes=vmem_limit,
        ),
        cost_estimate=cost,
    )(x2d, params.w_t, params.bias)

    if (M_pad, N_pad) != (M, N):
        out = out[:M, :N]
    return out.reshape(*x.shape[:-1], N)


# ------------------------------- init ---------------------------------------


def init_int_linear_params(key, in_features, out_features, dtype=jnp.float32):
    """Matches IntLinear.reset_parameters (xavier_uniform_ + zero bias)."""
    bound = (6.0 / (in_features + out_features)) ** 0.5
    weight = jax.random.uniform(
        key, (out_features, in_features), dtype=dtype, minval=-bound, maxval=bound
    )
    bias = jnp.zeros((out_features,), dtype=dtype)
    return weight, bias


# ------------------------------- test ---------------------------------------

if __name__ == "__main__":
    key = jax.random.PRNGKey(0)
    k_w, k_x, k_w2, k_x2, k_w3, k_x3 = jax.random.split(key, 6)

    # 1) Small shapes consistent with the module's forward (batch, seq, feat):
    #    single-K fast path, grid (1, 1).
    in_features, out_features, batch, seq = 32, 64, 2, 8
    weight, bias = init_int_linear_params(k_w, in_features, out_features)
    x = jax.random.normal(k_x, (batch, seq, in_features), dtype=jnp.float32)
    params = prepare_int_linear_params(weight, bias)
    out = jax.block_until_ready(int_linear_forward(x, params))
    ref = x @ weight.T + bias
    assert out.shape == (batch, seq, out_features)
    # bf16 MXU operands with f32 accumulation -> loose-ish tolerance.
    assert jnp.allclose(out, ref, atol=5e-2, rtol=5e-2), float(
        jnp.max(jnp.abs(out - ref))
    )

    # 2) Multi-K reduction with f32 output -> accumulate-in-place path,
    #    full (mt, nt, kt) = (2, 2, 2) grid via small tile caps.
    in2, out2_f, m2 = 256, 256, 64
    w2, b2 = init_int_linear_params(k_w2, in2, out2_f)
    x2 = jax.random.normal(k_x2, (m2, in2), dtype=jnp.float32)
    p2 = prepare_int_linear_params(w2, b2)
    o2 = jax.block_until_ready(
        int_linear_forward(x2, p2, tm_cap=32, tn_cap=128, tk_cap=128))
    ref2 = x2 @ w2.T + b2
    assert o2.shape == (m2, out2_f)
    assert jnp.allclose(o2, ref2, atol=5e-2, rtol=5e-2), float(
        jnp.max(jnp.abs(o2 - ref2))
    )

    # 3) Decode-like (mt=1, kt>1): bf16 output -> scratch-accumulator path,
    #    nt forced >= 2 (megacore), triple-buffered weight stream.
    in3, out3_f, m3 = 256, 512, 8
    w3, b3 = init_int_linear_params(k_w3, in3, out3_f)
    x3 = jax.random.normal(k_x3, (m3, in3), dtype=jnp.float32)
    p3 = prepare_int_linear_params(w3, b3)
    o3 = jax.block_until_ready(
        int_linear_forward(x3, p3, out_dtype=jnp.bfloat16, tk_cap=128))
    ref3 = x3 @ w3.T + b3
    assert o3.shape == (m3, out3_f) and o3.dtype == jnp.bfloat16
    assert jnp.allclose(o3.astype(jnp.float32), ref3, atol=1e-1, rtol=5e-2), float(
        jnp.max(jnp.abs(o3.astype(jnp.float32) - ref3))
    )

    print("KERNEL_OK")
</pallas_src>

<mosaic_0001>
module attributes {stable_mosaic.version = 11 : i64} {
  func.func @_linear_kernel_single_k(%arg0: i32, %arg1: i32, %arg2: memref<16x128xbf16, #tpu.memory_space<vmem>>, %arg3: memref<128x128xbf16, #tpu.memory_space<vmem>>, %arg4: memref<1x128xf32, #tpu.memory_space<vmem>>, %arg5: memref<16x128xf32, #tpu.memory_space<vmem>>) attributes {dimension_semantics = [#tpu.dimension_semantics<parallel>, #tpu.dimension_semantics<parallel>], iteration_bounds = array<i64: 1, 1>, scalar_prefetch = 0 : i64, scratch_operands = 0 : i64, tpu.core_type = #tpu.core_type<tc>, window_params = [{transform_indices = @transform_0, window_bounds = array<i64: 16, 128>}, {transform_indices = @transform_1, window_bounds = array<i64: 128, 128>}, {transform_indices = @transform_2, window_bounds = array<i64: 1, 128>}, {transform_indices = @transform_3, window_bounds = array<i64: 16, 128>}]} {
    %c0 = arith.constant 0 : index
    %c0_0 = arith.constant 0 : index
    %0 = vector.load %arg2[%c0, %c0_0] : memref<16x128xbf16, #tpu.memory_space<vmem>>, vector<16x128xbf16>
    %c0_1 = arith.constant 0 : index
    %c0_2 = arith.constant 0 : index
    %1 = vector.load %arg3[%c0_1, %c0_2] : memref<128x128xbf16, #tpu.memory_space<vmem>>, vector<128x128xbf16>
    %cst = arith.constant dense<0.000000e+00> : vector<16x128xf32>
    %2 = tpu.matmul %0, %1, %cst {dimension_numbers = #tpu.dot_dimension_numbers<[1], [0], [0], [1], [0, 0, 1, 1], [], []>} : vector<16x128xbf16>, vector<128x128xbf16>, vector<16x128xf32> -> vector<16x128xf32>
    %c0_3 = arith.constant 0 : index
    %c0_4 = arith.constant 0 : index
    %3 = vector.load %arg4[%c0_3, %c0_4] : memref<1x128xf32, #tpu.memory_space<vmem>>, vector<1x128xf32>
    %4 = vector.broadcast %3 : vector<1x128xf32> to vector<16x128xf32>
    %5 = arith.addf %2, %4 : vector<16x128xf32>
    %c0_5 = arith.constant 0 : index
    %c0_6 = arith.constant 0 : index
    %6 = vector.load %arg5[%c0_5, %c0_6] : memref<16x128xf32, #tpu.memory_space<vmem>>, vector<16x128xf32>
    tpu.vector_store %arg5[%c0_5, %c0_6], %5 {strides = array<i32>} : memref<16x128xf32, #tpu.memory_space<vmem>>, vector<16x128xf32>,
    return
  }
  func.func @transform_0(%arg0: i32, %arg1: i32) -> (i32, i32) {
    %c0_i32 = arith.constant 0 : i32
    %c0_i32_0 = arith.constant 0 : i32
    return %arg0, %c0_i32 : i32, i32
  }
  func.func @transform_1(%arg0: i32, %arg1: i32) -> (i32, i32) {
    %c0_i32 = arith.constant 0 : i32
    %c0_i32_0 = arith.constant 0 : i32
    return %c0_i32, %arg1 : i32, i32
  }
  func.func @transform_2(%arg0: i32, %arg1: i32) -> (i32, i32) {
    %c0_i32 = arith.constant 0 : i32
    %c0_i32_0 = arith.constant 0 : i32
    return %c0_i32, %arg1 : i32, i32
  }
  func.func @transform_3(%arg0: i32, %arg1: i32) -> (i32, i32) {
    %c0_i32 = arith.constant 0 : i32
    return %arg0, %arg1 : i32, i32
  }
}

</mosaic_0001>

<llo_original>
// kernel: tpu_custom_call.1
$region0: #{tpu_custom_call.1}
  #allocation0 [shape = 'u32[]', space=smem, size = 0x4, offset = 0x4, fixed_abs, tag = 'smem constant byte address 0x4 - core index']
  #allocation1 [shape = 'u32[72,128]{1,0:T(1,128)}', space=vmem, size = 0x9000, scoped, tag = 'internal scratch']
  %s0 = inlined_call_operand.hbm [shape: bf16[16,128], index: 0, kind: input, shape index: {}]
  %s1 = inlined_call_operand.hbm [shape: bf16[128,128], index: 1, kind: input, shape index: {}]
  %s2 = inlined_call_operand.vmem [shape: f32[1,128], index: 2, kind: input, shape index: {}]
  %s3 = inlined_call_operand.hbm [shape: f32[16,128], index: 3, kind: output, shape index: {}]
  %s4 = sld [smem:[#allocation0]]
  $region30: #{tpu_custom_call.1} parent=0
    _
  %s6 = ssub.s32 1, %s4
  %s7 = scalar_select 0, %s6, %s4
  $region1: #{tpu_custom_call.1} parent=0
    #allocation2 [shape = 'u8[4096]{0}', space=vmem, size = 0x1000, scoped, tag = 'input window, operand 0, single buffered']
    #allocation3 [shape = 's32[1]{0}', space=sflag, size = 0x4, scoped, tag = 'scoped memory for tpu_custom_call.1']
    #allocation4 [shape = 's32[1]{0}', space=sflag, size = 0x4, scoped, tag = 'scoped memory for tpu_custom_call.1']
    #allocation5 [shape = 'u8[32768]{0}', space=vmem, size = 0x8000, scoped, tag = 'input window, operand 1, single buffered']
    #allocation6 [shape = 's32[1]{0}', space=sflag, size = 0x4, scoped, tag = 'scoped memory for tpu_custom_call.1']
    #allocation7 [shape = 'u8[8192]{0}', space=vmem, size = 0x2000, scoped, tag = 'output window, operand 0, single buffered']
    %8 = vsyncpa [#allocation3], 0
    %9 = vsyncpa [#allocation6], 0
    %10 = vsyncpa [#allocation4], 0
    // Predicated region
    $region2: #{tpu_custom_call.1} parent=1 // pred_check
      _
    $region3: #{tpu_custom_call.1} parent=1 // pred_check_branch
      %12 = sbr.rel (0) target = $region5
    $region4: #{tpu_custom_call.1} parent=1 // pred_region
      %14 = vsyncadd [#allocation3], 0
      %s15 = sshll.u32 %s0, 4
      %s16 = int_to_ptr.hbm [resolvable:$true] %s15
      %s17 = sshll.u32 [#allocation2], 4
      %s18 = int_to_ptr.vmem [resolvable:$true] %s17
      %23 = dma.hbm_to_vmem [thread:$0]  %s16, 128, %s18, [#allocation3], 64, 64, 4
    $region5: #{tpu_custom_call.1} parent=1 // pred_fallthru
      _
    // Predicated region
    $region6: #{tpu_custom_call.1} parent=1 // pred_check
      _
    $region7: #{tpu_custom_call.1} parent=1 // pred_check_branch
      %25 = sbr.rel (0) target = $region9
    $region8: #{tpu_custom_call.1} parent=1 // pred_region
      %27 = vsyncadd [#allocation6], 0
      %s28 = sshll.u32 %s1, 4
      %s29 = int_to_ptr.hbm [resolvable:$true] %s28
      %s30 = sshll.u32 [#allocation5], 4
      %s31 = int_to_ptr.vmem [resolvable:$true] %s30
      %36 = dma.hbm_to_vmem [thread:$0]  %s29, 1024, %s31, [#allocation6], 64, 64, 4
    $region9: #{tpu_custom_call.1} parent=1 // pred_fallthru
      _
    // Predicated region
    $region10: #{tpu_custom_call.1} parent=1 // pred_check
      _
    $region11: #{tpu_custom_call.1} parent=1 // pred_check_branch
      %38 = sbr.rel (0) target = $region13
    $region12: #{tpu_custom_call.1} parent=1 // pred_region
      _
    $region13: #{tpu_custom_call.1} parent=1 // pred_fallthru
      _
    // Predicated region
    $region14: #{tpu_custom_call.1} parent=1 // pred_check
      _
    $region15: #{tpu_custom_call.1} parent=1 // pred_check_branch
      %40 = sbr.rel (0) target = $region17
    $region16: #{tpu_custom_call.1} parent=1 // pred_region
      %42 = dma.done [#allocation3], 128
    $region17: #{tpu_custom_call.1} parent=1 // pred_fallthru
      _
    // Predicated region
    $region18: #{tpu_custom_call.1} parent=1 // pred_check
      _
    $region19: #{tpu_custom_call.1} parent=1 // pred_check_branch
      %44 = sbr.rel (0) target = $region21
    $region20: #{tpu_custom_call.1} parent=1 // pred_region
      %46 = dma.done [#allocation6], 1024
    $region21: #{tpu_custom_call.1} parent=1 // pred_fallthru
      _
    %v47 = vld [vmem:[#allocation2] sm:$0xf]
    %v48 = vld [vmem:[#allocation2 + $0x4] sm:$0xf]
    %v49 = vld [vmem:[#allocation5] sm:$0xf]
    %v50 = vld [vmem:[#allocation5 + $0x4] sm:$0xf]
    %v51 = vld [vmem:[#allocation5 + $0x8] sm:$0xf]
    %v52 = vld [vmem:[#allocation5 + $0xc] sm:$0xf]
    %v53 = vld [vmem:[#allocation5 + $0x10] sm:$0xf]
    %v54 = vld [vmem:[#allocation5 + $0x14] sm:$0xf]
    %v55 = vld [vmem:[#allocation5 + $0x18] sm:$0xf]
    %v56 = vld [vmem:[#allocation5 + $0x1c] sm:$0xf]
    %v57 = vld [vmem:[#allocation5 + $0x20] sm:$0xf]
    %v58 = vld [vmem:[#allocation5 + $0x24] sm:$0xf]
    %v59 = vld [vmem:[#allocation5 + $0x28] sm:$0xf]
    %v60 = vld [vmem:[#allocation5 + $0x2c] sm:$0xf]
    %v61 = vld [vmem:[#allocation5 + $0x30] sm:$0xf]
    %v62 = vld [vmem:[#allocation5 + $0x34] sm:$0xf]
    %v63 = vld [vmem:[#allocation5 + $0x38] sm:$0xf]
    %v64 = vld [vmem:[#allocation5 + $0x3c] sm:$0xf]
    %v65 = vld [vmem:[%s2] sm:$0x1]
    %v67 = vperm.slane %v65, 0
    %v71 = vunpack.c.l.b16 %v47
    %v72 = vunpack.c.l.b16 %v48
    %v73 = vpack.c.b16 %v72, %v71
    %v91 = vunpack.c.l.b16 %v49
    %v92 = vunpack.c.l.b16 %v50
    %v93 = vunpack.c.l.b16 %v51
    %v94 = vunpack.c.l.b16 %v52
    %v95 = vunpack.c.l.b16 %v53
    %v96 = vunpack.c.l.b16 %v54
    %v97 = vunpack.c.l.b16 %v55
    %v98 = vunpack.c.l.b16 %v56
    %v99 = vunpack.c.l.b16 %v57
    %v100 = vunpack.c.l.b16 %v58
    %v101 = vunpack.c.l.b16 %v59
    %v102 = vunpack.c.l.b16 %v60
    %v103 = vunpack.c.l.b16 %v61
    %v104 = vunpack.c.l.b16 %v62
    %v105 = vunpack.c.l.b16 %v63
    %v106 = vunpack.c.l.b16 %v64
    %v107 = vpack.c.b16 %v92, %v91
    %v108 = vpack.c.b16 %v94, %v93
    %v109 = vpack.c.b16 %v96, %v95
    %v110 = vpack.c.b16 %v98, %v97
    %v111 = vpack.c.b16 %v100, %v99
    %v112 = vpack.c.b16 %v102, %v101
    %v113 = vpack.c.b16 %v104, %v103
    %v114 = vpack.c.b16 %v106, %v105
    %123 = vmatpush.bf16.msra.mxu0 %v114
    %124 = vmatpush.bf16.msra.mxu0 %v113
    %125 = vmatpush.bf16.msra.mxu0 %v112
    %126 = vmatpush.bf16.msra.mxu0 %v111
    %127 = vmatpush.bf16.msra.mxu0 %v110
    %128 = vmatpush.bf16.msra.mxu0 %v109
    %129 = vmatpush.bf16.msra.mxu0 %v108
    %130 = vmatpush.bf16.msra.mxu0 %v107
    %131 = vmatmul.bf16.gmra.mxu0 %v73
    %v132 = vpop.f32.mrf.mxu0
    %v133 = vadd.f32 %v67, %v132
    %v134 = vpop.f32.mrf.mxu0
    %v135 = vadd.f32 %v67, %v134
    %136 = vdwg.mxu0
    %137 = vst [vmem:[#allocation7] sm:$0xff] %v133
    %138 = vst [vmem:[#allocation7 + $0x8] sm:$0xff] %v135
    // Predicated region
    $region22: #{tpu_custom_call.1} parent=1 // pred_check
      _
    $region23: #{tpu_custom_call.1} parent=1 // pred_check_branch
      %140 = sbr.rel (0) target = $region25
    $region24: #{tpu_custom_call.1} parent=1 // pred_region
      %142 = vsyncadd [#allocation4], 0
      %s143 = sshll.u32 [#allocation7], 4
      %s144 = int_to_ptr.vmem [resolvable:$true] %s143
      %s145 = sshll.u32 %s3, 4
      %s146 = int_to_ptr.hbm [resolvable:$true] %s145
      %151 = dma.vmem_to_hbm [thread:$0]  %s144, 256, %s146, [#allocation4], 128, 128, 8
    $region25: #{tpu_custom_call.1} parent=1 // pred_fallthru
      _
    // Predicated region
    $region26: #{tpu_custom_call.1} parent=1 // pred_check
      _
    $region27: #{tpu_custom_call.1} parent=1 // pred_check_branch
      %153 = sbr.rel (0) target = $region29
    $region28: #{tpu_custom_call.1} parent=1 // pred_region
      %155 = dma.done [#allocation4], 256
    $region29: #{tpu_custom_call.1} parent=1 // pred_fallthru
      _
    %156 = vsyncpa [#allocation3], 1
    %157 = vsyncpa [#allocation6], 1
    %158 = vsyncpa [#allocation4], 1

</llo_original>
